<compile_context>
chip_gen: v7x
topology: tpu7x:2x2x1
jax: 0.10.0
libtpu: 0.0.40
codegen_flags: <defaults>
</compile_context>

<pallas_src>
import jax
import jax.numpy as jnp
from jax.experimental import pallas as pl
from jax.experimental.pallas import tpu as pltpu


def _make_rotary_kernel(r2, rotary_dim, head_dim, use_roll):
    """Kernel over one (seq_tile, nheads, headdim) block of q or k."""

    def kernel(qkv_ref, cos_ref, sin_ref, out_ref):
        x = qkv_ref[...]                       # (tS, H, D), input dtype
        c = cos_ref[...][:, None, :]           # (tS, 1, width) f32, broadcast over heads
        s = sin_ref[...][:, None, :]

        if use_roll:
            # cos table = [cos, cos], sin table = [-sin, sin]; the half-rotation
            # roll gives [x2, x1], so one mul-add produces the full rotated slab
            # and the store below is lane-dense / unmasked.
            x_ro = x[..., :rotary_dim].astype(jnp.float32)
            rolled = pltpu.roll(x_ro, shift=r2, axis=-1)     # [x2, x1]
            rot = (x_ro * c + rolled * s).astype(out_ref.dtype)
            if rotary_dim == head_dim:
                out_ref[...] = rot
            else:
                out_ref[..., :rotary_dim] = rot
                out_ref[..., rotary_dim:] = x[..., rotary_dim:]
        else:
            # Robust path for rotary_dim not a multiple of 128 (small head dims):
            # split halves, write results directly into out_ref slices (no
            # concatenate / stack temporaries).
            x1 = x[..., :r2].astype(jnp.float32)
            x2 = x[..., r2:rotary_dim].astype(jnp.float32)
            out_ref[..., :r2] = (x1 * c - x2 * s).astype(out_ref.dtype)
            out_ref[..., r2:rotary_dim] = (x1 * s + x2 * c).astype(out_ref.dtype)
            if rotary_dim < head_dim:
                out_ref[..., rotary_dim:] = x[..., rotary_dim:]

    return kernel


def _choose_seq_tile(S, H, D, itemsize, target_bytes=2 << 20):
    """Pick a sequence tile: ~2 MiB per qkv block, sublane-aligned for the dtype."""
    sublane = max(8, 32 // itemsize)           # 8 for f32, 16 for bf16, 32 for 8-bit
    t = max(1, target_bytes // (H * D * itemsize))
    t = (t // sublane) * sublane
    t = max(t, sublane)
    if S <= sublane:
        return S
    return min(t, S)


def apply_rotary_emb_qkv(qkv, cos, sin, cos_k=None, sin_k=None, interleaved=False):
    """Functional equivalent of ApplyRotaryEmbQKV_.forward (non-interleaved)."""
    if interleaved:
        # TODO(synk): interleaved=True (GPT-J even/odd pairing) not implemented in the kernel.
        raise NotImplementedError("interleaved=True is not supported by this Pallas kernel")

    B, S, three, H, D = qkv.shape
    assert three == 3
    rotary_seqlen, r2 = cos.shape
    rotary_dim = 2 * r2
    assert rotary_dim <= D
    assert S <= rotary_seqlen

    has_k_tables = cos_k is not None
    cos = cos[:S].astype(jnp.float32)
    sin = sin[:S].astype(jnp.float32)
    if has_k_tables:
        cos_k = cos_k[:S].astype(jnp.float32)
        sin_k = sin_k[:S].astype(jnp.float32)

    # Lane-aligned rotary_dim -> roll-based formulation with full-width stores.
    use_roll = (rotary_dim % 128 == 0)
    if use_roll:
        width = rotary_dim
        cos_q_tab = jnp.concatenate([cos, cos], axis=-1)
        sin_q_tab = jnp.concatenate([-sin, sin], axis=-1)
        if has_k_tables:
            cos_k_tab = jnp.concatenate([cos_k, cos_k], axis=-1)
            sin_k_tab = jnp.concatenate([-sin_k, sin_k], axis=-1)
    else:
        width = r2
        cos_q_tab, sin_q_tab = cos, sin
        if has_k_tables:
            cos_k_tab, sin_k_tab = cos_k, sin_k

    if has_k_tables:
        cos_tab = jnp.stack([cos_q_tab, cos_k_tab], axis=0)   # (2, S, width)
        sin_tab = jnp.stack([sin_q_tab, sin_k_tab], axis=0)
        tab_index = lambda b, t, s: (t, s, 0)
    else:
        cos_tab = cos_q_tab[None]                              # (1, S, width)
        sin_tab = sin_q_tab[None]
        tab_index = lambda b, t, s: (0, s, 0)

    itemsize = qkv.dtype.itemsize
    tS = _choose_seq_tile(S, H, D, itemsize)
    n_s = pl.cdiv(S, tS)

    # qkv blocks: (1, tS, 1, H, D) with batch and the q/k axis squeezed out.
    # The q/k axis index t only ever takes values {0, 1}: v is never touched,
    # and because the output aliases the input the v slice in HBM is preserved.
    qkv_spec = pl.BlockSpec((None, tS, None, H, D), lambda b, t, s: (b, s, t, 0, 0))
    tab_spec = pl.BlockSpec((None, tS, width), tab_index)

    # TODO(synk): for headdim < 128, folding pairs of heads into a 128-multiple
    # lane slab would make every store unmasked; not done here.
    kernel = _make_rotary_kernel(r2, rotary_dim, D, use_roll)

    return pl.pallas_call(
        kernel,
        out_shape=jax.ShapeDtypeStruct(qkv.shape, qkv.dtype),
        grid=(B, 2, n_s),
        in_specs=[qkv_spec, tab_spec, tab_spec],
        out_specs=qkv_spec,
        input_output_aliases={0: 0},   # in-place on qkv, like the PyTorch reference
        compiler_params=pltpu.CompilerParams(
            dimension_semantics=("parallel", "parallel", "parallel")),
    )(qkv, cos_tab, sin_tab)


class RotaryEmbedding:
    """JAX port of flash_attn.layers.rotary.RotaryEmbedding (forward only)."""

    def __init__(self, dim, base=10000.0, interleaved=False, scale_base=None):
        self.dim = dim
        self.base = float(base)
        self.inv_freq = 1.0 / (
            self.base ** (jnp.arange(0, dim, 2, dtype=jnp.float32) / dim)
        )
        self.interleaved = interleaved
        self.scale_base = scale_base
        self.scale = (
            (jnp.arange(0, dim, 2, dtype=jnp.float32) + 0.4 * dim) / (1.4 * dim)
            if scale_base is not None
            else None
        )

    def _cos_sin_cache(self, seqlen, dtype=jnp.float32):
        t = jnp.arange(seqlen, dtype=jnp.float32)
        freqs = jnp.outer(t, self.inv_freq)
        if self.scale is None:
            return jnp.cos(freqs).astype(dtype), jnp.sin(freqs).astype(dtype), None, None
        power = (jnp.arange(seqlen, dtype=jnp.float32) - seqlen // 2) / self.scale_base
        scale = self.scale ** power[:, None]
        cos = (jnp.cos(freqs) * scale).astype(dtype)
        sin = (jnp.sin(freqs) * scale).astype(dtype)
        cos_k = (jnp.cos(freqs) / scale).astype(dtype)
        sin_k = (jnp.sin(freqs) / scale).astype(dtype)
        return cos, sin, cos_k, sin_k

    def __call__(self, qkv, seqlen_offset: int = 0):
        seqlen = qkv.shape[1] + seqlen_offset
        # Tables kept in f32 for precision; the kernel casts on store.
        cos, sin, cos_k, sin_k = self._cos_sin_cache(seqlen, jnp.float32)
        cos, sin = cos[seqlen_offset:], sin[seqlen_offset:]
        if cos_k is not None:
            cos_k, sin_k = cos_k[seqlen_offset:], sin_k[seqlen_offset:]
        return apply_rotary_emb_qkv(qkv, cos, sin, cos_k, sin_k, self.interleaved)


def _reference_rotary(qkv, cos, sin, cos_k, sin_k):
    """Pure-JAX reference (non-interleaved), f32 math."""
    r2 = cos.shape[-1]
    cb, sb = cos[None, :, None, :], sin[None, :, None, :]
    cbk, sbk = cos_k[None, :, None, :], sin_k[None, :, None, :]

    def rot(x, c, s):
        x = x.astype(jnp.float32)
        x1, x2, rest = x[..., :r2], x[..., r2:2 * r2], x[..., 2 * r2:]
        return jnp.concatenate([x1 * c - x2 * s, x1 * s + x2 * c, rest], axis=-1)

    q = rot(qkv[:, :, 0], cb, sb).astype(qkv.dtype)
    k = rot(qkv[:, :, 1], cbk, sbk).astype(qkv.dtype)
    return jnp.stack([q, k, qkv[:, :, 2]], axis=2)


if __name__ == "__main__":
    key = jax.random.PRNGKey(0)
    k1, k2 = jax.random.split(key)
    batch, seqlen, nheads, headdim = 2, 8, 2, 32

    # Case 1: rotary_dim == headdim, no XPos scale.
    qkv1 = jax.random.normal(k1, (batch, seqlen, 3, nheads, headdim), dtype=jnp.float32)
    rope1 = RotaryEmbedding(dim=headdim, base=10000.0, interleaved=False, scale_base=None)
    cos1, sin1, _, _ = rope1._cos_sin_cache(seqlen)
    ref1 = _reference_rotary(qkv1, cos1, sin1, cos1, sin1)
    out1 = jax.block_until_ready(rope1(qkv1, seqlen_offset=0))
    assert out1.shape == qkv1.shape and out1.dtype == qkv1.dtype
    assert jnp.allclose(out1, ref1, atol=1e-5, rtol=1e-5)

    # Case 2: rotary_dim < headdim (pass-through tail) + XPos scaling (cos_k/sin_k path).
    qkv2 = jax.random.normal(k2, (batch, seqlen, 3, nheads, headdim), dtype=jnp.float32)
    rope2 = RotaryEmbedding(dim=16, base=10000.0, interleaved=False, scale_base=512)
    cos2, sin2, cos_k2, sin_k2 = rope2._cos_sin_cache(seqlen)
    ref2 = _reference_rotary(qkv2, cos2, sin2, cos_k2, sin_k2)
    out2 = jax.block_until_ready(rope2(qkv2, seqlen_offset=0))
    assert out2.shape == qkv2.shape and out2.dtype == qkv2.dtype
    assert jnp.allclose(out2, ref2, atol=1e-5, rtol=1e-5)

    print("KERNEL_OK")
</pallas_src>

<mosaic_0001>
module attributes {stable_mosaic.version = 11 : i64} {
  func.func @kernel(%arg0: i32, %arg1: i32, %arg2: i32, %arg3: memref<1x8x1x2x32xf32, #tpu.memory_space<vmem>>, %arg4: memref<1x8x16xf32, #tpu.memory_space<vmem>>, %arg5: memref<1x8x16xf32, #tpu.memory_space<vmem>>, %arg6: memref<1x8x1x2x32xf32, #tpu.memory_space<vmem>>) attributes {dimension_semantics = [#tpu.dimension_semantics<parallel>, #tpu.dimension_semantics<parallel>, #tpu.dimension_semantics<parallel>], iteration_bounds = array<i64: 2, 2, 1>, scalar_prefetch = 0 : i64, scratch_operands = 0 : i64, tpu.core_type = #tpu.core_type<tc>, window_params = [{transform_indices = @transform_0, window_bounds = array<i64: 1, 8, 1, 2, 32>}, {transform_indices = @transform_1, window_bounds = array<i64: 1, 8, 16>}, {transform_indices = @transform_2, window_bounds = array<i64: 1, 8, 16>}, {transform_indices = @transform_3, window_bounds = array<i64: 1, 8, 1, 2, 32>}]} {
    %c0 = arith.constant 0 : index
    %c0_0 = arith.constant 0 : index
    %c0_1 = arith.constant 0 : index
    %c0_2 = arith.constant 0 : index
    %c0_3 = arith.constant 0 : index
    %0 = vector.load %arg3[%c0, %c0_0, %c0_1, %c0_2, %c0_3] : memref<1x8x1x2x32xf32, #tpu.memory_space<vmem>>, vector<1x8x1x2x32xf32>
    %1 = vector.shape_cast %0 : vector<1x8x1x2x32xf32> to vector<8x2x32xf32>
    %c0_4 = arith.constant 0 : index
    %c0_5 = arith.constant 0 : index
    %c0_6 = arith.constant 0 : index
    %2 = vector.load %arg4[%c0_4, %c0_5, %c0_6] : memref<1x8x16xf32, #tpu.memory_space<vmem>>, vector<1x8x16xf32>
    %3 = vector.shape_cast %2 : vector<1x8x16xf32> to vector<8x16xf32>
    %4 = vector.shape_cast %3 : vector<8x16xf32> to vector<8x1x16xf32>
    %c0_7 = arith.constant 0 : index
    %c0_8 = arith.constant 0 : index
    %c0_9 = arith.constant 0 : index
    %5 = vector.load %arg5[%c0_7, %c0_8, %c0_9] : memref<1x8x16xf32, #tpu.memory_space<vmem>>, vector<1x8x16xf32>
    %6 = vector.shape_cast %5 : vector<1x8x16xf32> to vector<8x16xf32>
    %7 = vector.shape_cast %6 : vector<8x16xf32> to vector<8x1x16xf32>
    %8 = vector.extract_strided_slice %1 {offsets = [0, 0, 0], sizes = [8, 2, 16], strides = [1, 1, 1]} : vector<8x2x32xf32> to vector<8x2x16xf32>
    %9 = vector.extract_strided_slice %1 {offsets = [0, 0, 16], sizes = [8, 2, 16], strides = [1, 1, 1]} : vector<8x2x32xf32> to vector<8x2x16xf32>
    %10 = vector.broadcast %4 : vector<8x1x16xf32> to vector<8x2x16xf32>
    %11 = arith.mulf %8, %10 : vector<8x2x16xf32>
    %12 = vector.broadcast %7 : vector<8x1x16xf32> to vector<8x2x16xf32>
    %13 = arith.mulf %9, %12 : vector<8x2x16xf32>
    %14 = arith.subf %11, %13 : vector<8x2x16xf32>
    %c0_10 = arith.constant 0 : index
    %c0_11 = arith.constant 0 : index
    %c0_12 = arith.constant 0 : index
    %c0_13 = arith.constant 0 : index
    %c0_14 = arith.constant 0 : index
    %15 = vector.load %arg6[%c0_10, %c0_11, %c0_12, %c0_13, %c0_14] : memref<1x8x1x2x32xf32, #tpu.memory_space<vmem>>, vector<1x8x1x2x16xf32>
    %16 = vector.shape_cast %15 : vector<1x8x1x2x16xf32> to vector<8x2x16xf32>
    %17 = vector.shape_cast %14 : vector<8x2x16xf32> to vector<1x8x1x2x16xf32>
    tpu.vector_store %arg6[%c0_10, %c0_11, %c0_12, %c0_13, %c0_14], %17 {strides = array<i32>} : memref<1x8x1x2x32xf32, #tpu.memory_space<vmem>>, vector<1x8x1x2x16xf32>,
    %18 = vector.broadcast %7 : vector<8x1x16xf32> to vector<8x2x16xf32>
    %19 = arith.mulf %8, %18 : vector<8x2x16xf32>
    %20 = vector.broadcast %4 : vector<8x1x16xf32> to vector<8x2x16xf32>
    %21 = arith.mulf %9, %20 : vector<8x2x16xf32>
    %22 = arith.addf %19, %21 : vector<8x2x16xf32>
    %c0_15 = arith.constant 0 : index
    %c0_16 = arith.constant 0 : index
    %c0_17 = arith.constant 0 : index
    %c0_18 = arith.constant 0 : index
    %c16 = arith.constant 16 : index
    %23 = vector.load %arg6[%c0_15, %c0_16, %c0_17, %c0_18, %c16] : memref<1x8x1x2x32xf32, #tpu.memory_space<vmem>>, vector<1x8x1x2x16xf32>
    %24 = vector.shape_cast %23 : vector<1x8x1x2x16xf32> to vector<8x2x16xf32>
    %25 = vector.shape_cast %22 : vector<8x2x16xf32> to vector<1x8x1x2x16xf32>
    tpu.vector_store %arg6[%c0_15, %c0_16, %c0_17, %c0_18, %c16], %25 {strides = array<i32>} : memref<1x8x1x2x32xf32, #tpu.memory_space<vmem>>, vector<1x8x1x2x16xf32>,
    return
  }
  func.func @transform_0(%arg0: i32, %arg1: i32, %arg2: i32) -> (i32, i32, i32, i32, i32) {
    %c0_i32 = arith.constant 0 : i32
    %c0_i32_0 = arith.constant 0 : i32
    %c0_i32_1 = arith.constant 0 : i32
    return %arg0, %arg2, %arg1, %c0_i32, %c0_i32_0 : i32, i32, i32, i32, i32
  }
  func.func @transform_1(%arg0: i32, %arg1: i32, %arg2: i32) -> (i32, i32, i32) {
    %c0_i32 = arith.constant 0 : i32
    %c0_i32_0 = arith.constant 0 : i32
    %c0_i32_1 = arith.constant 0 : i32
    return %c0_i32, %arg2, %c0_i32_0 : i32, i32, i32
  }
  func.func @transform_2(%arg0: i32, %arg1: i32, %arg2: i32) -> (i32, i32, i32) {
    %c0_i32 = arith.constant 0 : i32
    %c0_i32_0 = arith.constant 0 : i32
    %c0_i32_1 = arith.constant 0 : i32
    return %c0_i32, %arg2, %c0_i32_0 : i32, i32, i32
  }
  func.func @transform_3(%arg0: i32, %arg1: i32, %arg2: i32) -> (i32, i32, i32, i32, i32) {
    %c0_i32 = arith.constant 0 : i32
    %c0_i32_0 = arith.constant 0 : i32
    %c0_i32_1 = arith.constant 0 : i32
    return %arg0, %arg2, %arg1, %c0_i32, %c0_i32_0 : i32, i32, i32, i32, i32
  }
}

</mosaic_0001>

<llo_original>
// kernel: tpu_custom_call.1
$region0: #{tpu_custom_call.1}
  #allocation0 [shape = 'u32[]', space=smem, size = 0x4, offset = 0x4, fixed_abs, tag = 'smem constant byte address 0x4 - core index']
  #allocation1 [shape = 'u32[144,128]{1,0:T(1,128)}', space=vmem, size = 0x12000, scoped, tag = 'internal scratch']
  %s0 = inlined_call_operand.hbm [shape: f32[2,8,3,2,32], index: 0, kind: input, shape index: {}, may-alias: {0,3}]
  %s1 = inlined_call_operand.vmem [shape: f32[1,8,16], index: 1, kind: input, shape index: {}]
  %s2 = inlined_call_operand.vmem [shape: f32[1,8,16], index: 2, kind: input, shape index: {}]
  %s3 = inlined_call_operand.hbm [shape: f32[2,8,3,2,32], index: 3, kind: output, shape index: {}, may-alias: {0,3}]
  %s4 = sld [smem:[#allocation0]]
  $region49: #{tpu_custom_call.1} parent=0
    _
  %s6 = ssub.s32 1, %s4
  %s7 = scalar_select 0, %s6, %s4
  $region1: #{tpu_custom_call.1} parent=0
    #allocation2 [shape = 'u8[16384]{0}', space=vmem, size = 0x4000, scoped, tag = 'input window, operand 0']
    #allocation3 [shape = 's32[2]{0}', space=sflag, size = 0x8, scoped, tag = 'scoped memory for tpu_custom_call.1']
    #allocation4 [shape = 's32[2]{0}', space=sflag, size = 0x8, scoped, tag = 'scoped memory for tpu_custom_call.1']
    #allocation5 [shape = 'u8[16384]{0}', space=vmem, size = 0x4000, scoped, tag = 'output window, operand 0']
    %8 = vsyncpa [#allocation3], 0
    %s9 = scalar_lea.sflag [#allocation3], 1
    %10 = vsyncpa %s9, 0
    %11 = vsyncpa [#allocation4], 0
    %s12 = scalar_lea.sflag [#allocation4], 1
    %13 = vsyncpa %s12, 0
    loop: start=0, step=1, limit=6
    $region2: #{tpu_custom_call.1} parent=1 // loop_pre_header
      _
    $region3: #{tpu_custom_call.1} parent=1 // loop_header
      %s15 = sphi 0, %s19
      %p16 = scmp.ge.s32.totalorder %s15, 6
      %s22 = sphi 0, %s41
      %s23 = sphi 0, %s37
      %s24 = sphi 0, %s33
      %s25 = sphi 0, %s22
      %s26 = sphi 0, %s23
      %s27 = sphi 0, %s24
      %s28 = sphi 0, %s25
      %s29 = sphi 0, %s26
      %s30 = sphi 0, %s27
      %s48 = sphi 0, %s50
      %s51 = sphi 0, %s48
      %s52 = sphi 0, %s51
      %s68 = sphi 0, %s52
      %s74 = sphi 0, %s76
      %s77 = sphi 0, %s74
      %s78 = sphi 0, %s77
      %s94 = sphi 0, %s78
      %s100 = sphi 0, %s102
      %s103 = sphi 0, %s100
      %s104 = sphi 0, %s103
      %s120 = sphi 0, %s104
      %s130 = sphi 0, %s132
      %s133 = sphi 0, %s130
      %s134 = sphi 0, %s133
      %s150 = sphi 0, %s134
    $region4: #{tpu_custom_call.1} parent=1 // loop_header_branch
      %18 = sbr.rel (%p16) target = $region8
    $region5: #{tpu_custom_call.1} parent=1 // loop_body
      %s20 = ssub.s32 %s15, 1
      %s21 = ssub.s32 %s15, 2
      %s31 = sadd.s32 1, %s24
      %p32 = scmp.ge.s32.totalorder %s31, 1
      %s33 = scalar_select %p32, 0, %s31
      %s34 = sadd.s32 1, %s23
      %s35 = scalar_select %p32, %s34, %s23
      %p36 = scmp.ge.s32.totalorder %s35, 2
      %s37 = scalar_select %p36, 0, %s35
      %s38 = sadd.s32 1, %s22
      %s39 = scalar_select %p36, %s38, %s22
      %p40 = scmp.ge.s32.totalorder %s39, 2
      %s41 = scalar_select %p40, 0, %s39
      %s42 = ssub.s32 %s22, %s41
      %s43 = ssub.s32 %s24, %s33
      %s44 = sor.u32 %s42, %s43
      %s45 = ssub.s32 %s23, %s37
      %s46 = sor.u32 %s44, %s45
      %p47 = scmp.eq.s32.totalorder %s46, 0
      %s49 = sadd.s32 %s48, 1
      %s50 = scalar_select %p47, %s48, %s49
      %p53 = pneg %p47
      %p54 = scmp.eq.s32.totalorder %s15, 3
      %p55 = por %p53, %p54
      %p56 = scmp.ne.s32.totalorder %s48, %s51
      %p57 = scmp.eq.s32.totalorder %s15, 0
      %p58 = por %p56, %p57
      %p59 = scmp.ne.s32.totalorder %s48, %s51
      %p60 = scmp.eq.s32.totalorder %s20, 3
      %p61 = por %p59, %p60
      %p62 = scmp.ne.s32.totalorder %s51, %s52
      %p63 = scmp.eq.s32.totalorder %s20, 0
      %p64 = por %p62, %p63
      %p65 = scmp.ne.s32.totalorder %s51, %s52
      %p66 = scmp.eq.s32.totalorder %s21, 3
      %p67 = por %p65, %p66
      %p69 = scmp.ne.s32.totalorder %s52, %s68
      %p70 = scmp.eq.s32.totalorder %s21, 0
      %p71 = por %p69, %p70
      %s72 = ssub.s32 %s24, %s33
      %p73 = scmp.eq.s32.totalorder %s72, 0
      %s75 = sadd.s32 %s74, 1
      %s76 = scalar_select %p73, %s74, %s75
      %p79 = pneg %p73
      %p80 = scmp.eq.s32.totalorder %s15, 3
      %p81 = por %p79, %p80
      %p82 = scmp.ne.s32.totalorder %s74, %s77
      %p83 = scmp.eq.s32.totalorder %s15, 0
      %p84 = por %p82, %p83
      %p85 = scmp.ne.s32.totalorder %s74, %s77
      %p86 = scmp.eq.s32.totalorder %s20, 3
      %p87 = por %p85, %p86
      %p88 = scmp.ne.s32.totalorder %s77, %s78
      %p89 = scmp.eq.s32.totalorder %s20, 0
      %p90 = por %p88, %p89
      %p91 = scmp.ne.s32.totalorder %s77, %s78
      %p92 = scmp.eq.s32.totalorder %s21, 3
      %p93 = por %p91, %p92
      %p95 = scmp.ne.s32.totalorder %s78, %s94
      %p96 = scmp.eq.s32.totalorder %s21, 0
      %p97 = por %p95, %p96
      %s98 = ssub.s32 %s24, %s33
      %p99 = scmp.eq.s32.totalorder %s98, 0
      %s101 = sadd.s32 %s100, 1
      %s102 = scalar_select %p99, %s100, %s101
      %p105 = pneg %p99
      %p106 = scmp.eq.s32.totalorder %s15, 3
      %p107 = por %p105, %p106
      %p108 = scmp.ne.s32.totalorder %s100, %s103
      %p109 = scmp.eq.s32.totalorder %s15, 0
      %p110 = por %p108, %p109
      %p111 = scmp.ne.s32.totalorder %s100, %s103
      %p112 = scmp.eq.s32.totalorder %s20, 3
      %p113 = por %p111, %p112
      %p114 = scmp.ne.s32.totalorder %s103, %s104
      %p115 = scmp.eq.s32.totalorder %s20, 0
      %p116 = por %p114, %p115
      %p117 = scmp.ne.s32.totalorder %s103, %s104
      %p118 = scmp.eq.s32.totalorder %s21, 3
      %p119 = por %p117, %p118
      %p121 = scmp.ne.s32.totalorder %s104, %s120
      %p122 = scmp.eq.s32.totalorder %s21, 0
      %p123 = por %p121, %p122
      %s124 = ssub.s32 %s22, %s41
      %s125 = ssub.s32 %s24, %s33
      %s126 = sor.u32 %s124, %s125
      %s127 = ssub.s32 %s23, %s37
      %s128 = sor.u32 %s126, %s127
      %p129 = scmp.eq.s32.totalorder %s128, 0
      %s131 = sadd.s32 %s130, 1
      %s132 = scalar_select %p129, %s130, %s131
      %p135 = pneg %p129
      %p136 = scmp.eq.s32.totalorder %s15, 3
      %p137 = por %p135, %p136
      %p138 = scmp.ne.s32.totalorder %s130, %s133
      %p139 = scmp.eq.s32.totalorder %s15, 0
      %p140 = por %p138, %p139
      %p141 = scmp.ne.s32.totalorder %s130, %s133
      %p142 = scmp.eq.s32.totalorder %s20, 3
      %p143 = por %p141, %p142
      %p144 = scmp.ne.s32.totalorder %s133, %s134
      %p145 = scmp.eq.s32.totalorder %s20, 0
      %p146 = por %p144, %p145
      %p147 = scmp.ne.s32.totalorder %s133, %s134
      %p148 = scmp.eq.s32.totalorder %s21, 3
      %p149 = por %p147, %p148
      %p151 = scmp.ne.s32.totalorder %s134, %s150
      %p152 = scmp.eq.s32.totalorder %s21, 0
      %p153 = por %p151, %p152
      %p154 = scmp.le.s32.totalorder 1, %s15
      %p155 = scmp.lt.s32.totalorder %s15, 5
      %p156 = pnand %p154, %p155
      %p157 = pneg %p156
      // Predicated region
      $region9: #{tpu_custom_call.1} parent=5 // pred_check
        _
      $region10: #{tpu_custom_call.1} parent=5 // pred_check_branch
        %159 = sbr.rel (%p156) target = $region12
      $region11: #{tpu_custom_call.1} parent=5 // pred_region
        %s160 = ssub.s32 %s15, 1
        // Predicated region
        $region13: #{tpu_custom_call.1} parent=11 // pred_check
          %p161 = pneg %p90
        $region14: #{tpu_custom_call.1} parent=11 // pred_check_branch
          %163 = sbr.rel (%p161) target = $region16
        $region15: #{tpu_custom_call.1} parent=11 // pred_region
          %p164 = scmp.lt.s32.totalorder %s27, 0
          %s165 = scalar_select %p164, %s27, 0
          %s166 = smul.addr %s165, 8
          %s167 = scalar_lea.vmem %s1, %s166
        $region16: #{tpu_custom_call.1} parent=11 // pred_fallthru
          _
        // Predicated region
        $region17: #{tpu_custom_call.1} parent=11 // pred_check
          %p168 = pneg %p116
        $region18: #{tpu_custom_call.1} parent=11 // pred_check_branch
          %170 = sbr.rel (%p168) target = $region20
        $region19: #{tpu_custom_call.1} parent=11 // pred_region
          %p171 = scmp.lt.s32.totalorder %s27, 0
          %s172 = scalar_select %p171, %s27, 0
          %s173 = smul.addr %s172, 8
          %s174 = scalar_lea.vmem %s2, %s173
        $region20: #{tpu_custom_call.1} parent=11 // pred_fallthru
          _
      $region12: #{tpu_custom_call.1} parent=5 // pred_fallthru
        _
      %p175 = scmp.lt.s32.totalorder %s15, 4
      // Predicated region
      $region21: #{tpu_custom_call.1} parent=5 // pred_check
        %p176 = pneg %p175
      $region22: #{tpu_custom_call.1} parent=5 // pred_check_branch
        %178 = sbr.rel (%p176) target = $region24
      $region23: #{tpu_custom_call.1} parent=5 // pred_region
        // Predicated region
        $region25: #{tpu_custom_call.1} parent=23 // pred_check
          %p179 = pneg %p58
        $region26: #{tpu_custom_call.1} parent=23 // pred_check_branch
          %181 = sbr.rel (%p179) target = $region28
        $region27: #{tpu_custom_call.1} parent=23 // pred_region
          %s182 = sand.u32 %s48, 1
          %s183 = scalar_lea.sflag [#allocation3], %s182
          %s184 = sand.u32 %s48, 1
          %s185 = smul.addr %s184, 16
          %s186 = scalar_lea.vmem [#allocation2], %s185
          %s187 = smul.u32 8, %s24
          %s189 = ssub.s32 256, 256
          %190 = vsyncadd %s183, %s189
          %s191 = smul.addr %s187, 3
          %s192 = sadd.s32 %s23, %s191
          %s193 = smul.addr %s22, 24
          %s194 = sadd.s32 %s192, %s193
          %s195 = smul.addr %s194, 32
          %s196 = scalar_lea.hbm %s0, %s195
          %s197 = sshll.u32 %s186, 4
          %s198 = int_to_ptr.vmem [resolvable:$true] %s197
          %203 = dma.hbm_to_vmem [thread:$0]  %s196, 256, %s198, %s183, 96, 32, 2
        $region28: #{tpu_custom_call.1} parent=23 // pred_fallthru
          _
      $region24: #{tpu_custom_call.1} parent=5 // pred_fallthru
        _
      %p204 = scmp.le.s32.totalorder 1, %s15
      %p205 = scmp.lt.s32.totalorder %s15, 5
      %p206 = pnand %p204, %p205
      %p207 = pneg %p206
      // Predicated region
      $region29: #{tpu_custom_call.1} parent=5 // pred_check
        _
      $region30: #{tpu_custom_call.1} parent=5 // pred_check_branch
        %209 = sbr.rel (%p206) target = $region32
      $region31: #{tpu_custom_call.1} parent=5 // pred_region
        %s210 = ssub.s32 %s15, 1
        %s211 = sand.u32 %s51, 1
        %s212 = scalar_lea.sflag [#allocation3], %s211
        %s213 = sand.u32 %s51, 1
        %s214 = smul.addr %s213, 16
        %s215 = scalar_lea.vmem [#allocation2], %s214
        // Predicated region
        $region33: #{tpu_custom_call.1} parent=31 // pred_check
          %p216 = pneg %p64
        $region34: #{tpu_custom_call.1} parent=31 // pred_check_branch
          %218 = sbr.rel (%p216) target = $region36
        $region35: #{tpu_custom_call.1} parent=31 // pred_region
          %219 = dma.done %s212, 256
        $region36: #{tpu_custom_call.1} parent=31 // pred_fallthru
          _
        %s220 = sand.u32 %s51, 1
        %s221 = scalar_lea.sflag [#allocation3], %s220
        %s222 = sand.u32 %s51, 1
        %s223 = smul.addr %s222, 16
        %s224 = scalar_lea.vmem [#allocation2], %s223
        %p225 = pneg %p64
        %p226 = pneg %p61
        %p227 = scmp.lt.s32.totalorder %s27, 0
        %s228 = scalar_select %p227, %s27, 0
        %s229 = smul.addr %s228, 8
        %s230 = scalar_lea.vmem %s1, %s229
        %p231 = pneg %p90
        %p232 = pneg %p87
        %p233 = scmp.lt.s32.totalorder %s27, 0
        %s234 = scalar_select %p233, %s27, 0
        %s235 = smul.addr %s234, 8
        %s236 = scalar_lea.vmem %s2, %s235
        %p237 = pneg %p116
        %p238 = pneg %p113
        %p239 = pneg %p146
        %p240 = pneg %p143
        %s241 = sand.u32 %s133, 1
        %s242 = scalar_lea.sflag [#allocation4], %s241
        %s243 = sand.u32 %s133, 1
        %s244 = smul.addr %s243, 16
        %s245 = scalar_lea.vmem [#allocation5], %s244
        %s246 = smul.u32 8, %s27
        %p247 = scmp.lt.s32.totalorder %s27, 0
        %s248 = scalar_select %p247, %s27, 0
        %s249 = smul.addr %s248, 8
        %s250 = scalar_lea.vmem %s1, %s249
        %p251 = scmp.lt.s32.totalorder %s27, 0
        %s252 = scalar_select %p251, %s27, 0
        %s253 = smul.addr %s252, 8
        %s254 = scalar_lea.vmem %s2, %s253
        %s255 = smul.u32 8, %s27
        %v256 = vld [vmem:[%s215] sm:$0x3]
        %v257 = vld [vmem:[%s215 + $0x2] sm:$0x3]
        %v258 = vld [vmem:[%s215 + $0x4] sm:$0x3]
        %v259 = vld [vmem:[%s215 + $0x6] sm:$0x3]
        %v260 = vld [vmem:[%s215 + $0x8] sm:$0x3]
        %v261 = vld [vmem:[%s215 + $0xa] sm:$0x3]
        %v262 = vld [vmem:[%s215 + $0xc] sm:$0x3]
        %v263 = vld [vmem:[%s215 + $0xe] sm:$0x3]
        %v264 = vld [vmem:[%s250] sm:$0xff]
        %v266 = vcombine.high %v264, %v264
        %v268 = vunpack.c.l.s4 1966171168
        %v269 = vunpack.c.0.s8 %v268
        %v270 = vlaneseq
        %v271 = vshrl.u32 %v270, 7
        %v272 = vsub.s32 %v269, %v271
        %v273 = vrot.slane %v264, %v272
        %v275 = vunpack.c.l.s4 1966171168
        %v276 = vunpack.c.0.s8 %v275
        %v277 = vlaneseq
        %v278 = vshrl.u32 %v277, 7
        %v279 = vsub.s32 %v276, %v278
        %v280 = vrot.slane %v266, %v279
        %v281 = vcombine.high %v273, %v273
        %v282 = vcombine.high %v280, %v280
        %v284 = vunpack.c.l.s4 1966171168
        %v285 = vunpack.c.0.s8 %v284
        %v286 = vlaneseq
        %v287 = vshrl.u32 %v286, 7
        %v288 = vsub.s32 %v285, %v287
        %v289 = vrot.slane %v273, %v288
        %v291 = vunpack.c.l.s4 1966171168
        %v292 = vunpack.c.0.s8 %v291
        %v293 = vlaneseq
        %v294 = vshrl.u32 %v293, 7
        %v295 = vsub.s32 %v292, %v294
        %v296 = vrot.slane %v280, %v295
        %v298 = vunpack.c.l.s4 1966171168
        %v299 = vunpack.c.0.s8 %v298
        %v300 = vlaneseq
        %v301 = vshrl.u32 %v300, 7
        %v302 = vsub.s32 %v299, %v301
        %v303 = vrot.slane %v281, %v302
        %v305 = vunpack.c.l.s4 1966171168
        %v306 = vunpack.c.0.s8 %v305
        %v307 = vlaneseq
        %v308 = vshrl.u32 %v307, 7
        %v309 = vsub.s32 %v306, %v308
        %v310 = vrot.slane %v282, %v309
        %v311 = vcombine.high %v289, %v289
        %v312 = vcombine.high %v296, %v296
        %v313 = vcombine.high %v303, %v303
        %v314 = vcombine.high %v310, %v310
        %v315 = vld [vmem:[%s254] sm:$0xff]
        %v317 = vcombine.high %v315, %v315
        %v319 = vunpack.c.l.s4 1966171168
        %v320 = vunpack.c.0.s8 %v319
        %v321 = vlaneseq
        %v322 = vshrl.u32 %v321, 7
        %v323 = vsub.s32 %v320, %v322
        %v324 = vrot.slane %v315, %v323
        %v326 = vunpack.c.l.s4 1966171168
        %v327 = vunpack.c.0.s8 %v326
        %v328 = vlaneseq
        %v329 = vshrl.u32 %v328, 7
        %v330 = vsub.s32 %v327, %v329
        %v331 = vrot.slane %v317, %v330
        %v332 = vcombine.high %v324, %v324
        %v333 = vcombine.high %v331, %v331
        %v335 = vunpack.c.l.s4 1966171168
        %v336 = vunpack.c.0.s8 %v335
        %v337 = vlaneseq
        %v338 = vshrl.u32 %v337, 7
        %v339 = vsub.s32 %v336, %v338
        %v340 = vrot.slane %v324, %v339
        %v342 = vunpack.c.l.s4 1966171168
        %v343 = vunpack.c.0.s8 %v342
        %v344 = vlaneseq
        %v345 = vshrl.u32 %v344, 7
        %v346 = vsub.s32 %v343, %v345
        %v347 = vrot.slane %v331, %v346
        %v349 = vunpack.c.l.s4 1966171168
        %v350 = vunpack.c.0.s8 %v349
        %v351 = vlaneseq
        %v352 = vshrl.u32 %v351, 7
        %v353 = vsub.s32 %v350, %v352
        %v354 = vrot.slane %v332, %v353
        %v356 = vunpack.c.l.s4 1966171168
        %v357 = vunpack.c.0.s8 %v356
        %v358 = vlaneseq
        %v359 = vshrl.u32 %v358, 7
        %v360 = vsub.s32 %v357, %v359
        %v361 = vrot.slane %v333, %v360
        %v362 = vcombine.high %v340, %v340
        %v363 = vcombine.high %v347, %v347
        %v364 = vcombine.high %v354, %v354
        %v365 = vcombine.high %v361, %v361
        %v366 = vlaneseq
        %v367 = vshrl.u32 %v366, 7
        %v368 = vsub.s32 0, %v367
        %v369 = vrot.slane %v289, %v368
        %v370 = vlaneseq
        %v371 = vshrl.u32 %v370, 7
        %v372 = vsub.s32 0, %v371
        %v373 = vrot.slane %v303, %v372
        %v374 = vlaneseq
        %v375 = vshrl.u32 %v374, 7
        %v376 = vsub.s32 0, %v375
        %v377 = vrot.slane %v311, %v376
        %v378 = vlaneseq
        %v379 = vshrl.u32 %v378, 7
        %v380 = vsub.s32 0, %v379
        %v381 = vrot.slane %v313, %v380
        %v382 = vlaneseq
        %v383 = vshrl.u32 %v382, 7
        %v384 = vsub.s32 0, %v383
        %v385 = vrot.slane %v296, %v384
        %v386 = vlaneseq
        %v387 = vshrl.u32 %v386, 7
        %v388 = vsub.s32 0, %v387
        %v389 = vrot.slane %v310, %v388
        %v390 = vlaneseq
        %v391 = vshrl.u32 %v390, 7
        %v392 = vsub.s32 0, %v391
        %v393 = vrot.slane %v312, %v392
        %v394 = vlaneseq
        %v395 = vshrl.u32 %v394, 7
        %v396 = vsub.s32 0, %v395
        %v397 = vrot.slane %v314, %v396
        %v406 = vmul.f32 %v256, %v369
        %v407 = vmul.f32 %v257, %v373
        %v408 = vmul.f32 %v258, %v377
        %v409 = vmul.f32 %v259, %v381
        %v410 = vmul.f32 %v260, %v385
        %v411 = vmul.f32 %v261, %v389
        %v412 = vmul.f32 %v262, %v393
        %v413 = vmul.f32 %v263, %v397
        %v414 = vlaneseq
        %v415 = vshrl.u32 %v414, 7
        %v416 = vsub.s32 0, %v415
        %v417 = vrot.slane %v340, %v416
        %v418 = vlaneseq
        %v419 = vshrl.u32 %v418, 7
        %v420 = vsub.s32 0, %v419
        %v421 = vrot.slane %v354, %v420
        %v422 = vlaneseq
        %v423 = vshrl.u32 %v422, 7
        %v424 = vsub.s32 0, %v423
        %v425 = vrot.slane %v362, %v424
        %v426 = vlaneseq
        %v427 = vshrl.u32 %v426, 7
        %v428 = vsub.s32 0, %v427
        %v429 = vrot.slane %v364, %v428
        %v430 = vlaneseq
        %v431 = vshrl.u32 %v430, 7
        %v432 = vsub.s32 0, %v431
        %v433 = vrot.slane %v347, %v432
        %v434 = vlaneseq
        %v435 = vshrl.u32 %v434, 7
        %v436 = vsub.s32 0, %v435
        %v437 = vrot.slane %v361, %v436
        %v438 = vlaneseq
        %v439 = vshrl.u32 %v438, 7
        %v440 = vsub.s32 0, %v439
        %v441 = vrot.slane %v363, %v440
        %v442 = vlaneseq
        %v443 = vshrl.u32 %v442, 7
        %v444 = vsub.s32 0, %v443
        %v445 = vrot.slane %v365, %v444
        %454 = vrot.lane.b32.xlu0 %v417, 16
        %v455 = vpop.permute.xlu0 %454
        %456 = vrot.lane.b32.xlu0 %v421, 16
        %v457 = vpop.permute.xlu0 %456
        %458 = vrot.lane.b32.xlu0 %v425, 16
        %v459 = vpop.permute.xlu0 %458
        %460 = vrot.lane.b32.xlu0 %v429, 16
        %v461 = vpop.permute.xlu0 %460
        %462 = vrot.lane.b32.xlu0 %v433, 16
        %v463 = vpop.permute.xlu0 %462
        %464 = vrot.lane.b32.xlu0 %v437, 16
        %v465 = vpop.permute.xlu0 %464
        %466 = vrot.lane.b32.xlu0 %v441, 16
        %v467 = vpop.permute.xlu0 %466
        %468 = vrot.lane.b32.xlu0 %v445, 16
        %v469 = vpop.permute.xlu0 %468
        %v478 = vmul.f32 %v256, %v455
        %v479 = vmul.f32 %v257, %v457
        %v480 = vmul.f32 %v258, %v459
        %v481 = vmul.f32 %v259, %v461
        %v482 = vmul.f32 %v260, %v463
        %v483 = vmul.f32 %v261, %v465
        %v484 = vmul.f32 %v262, %v467
        %v485 = vmul.f32 %v263, %v469
        %494 = vrot.lane.b32.xlu0 %v478, 112
        %v495 = vpop.permute.xlu0 %494
        %496 = vrot.lane.b32.xlu0 %v479, 112
        %v497 = vpop.permute.xlu0 %496
        %498 = vrot.lane.b32.xlu0 %v480, 112
        %v499 = vpop.permute.xlu0 %498
        %500 = vrot.lane.b32.xlu0 %v481, 112
        %v501 = vpop.permute.xlu0 %500
        %502 = vrot.lane.b32.xlu0 %v482, 112
        %v503 = vpop.permute.xlu0 %502
        %504 = vrot.lane.b32.xlu0 %v483, 112
        %v505 = vpop.permute.xlu0 %504
        %506 = vrot.lane.b32.xlu0 %v484, 112
        %v507 = vpop.permute.xlu0 %506
        %508 = vrot.lane.b32.xlu0 %v485, 112
        %v509 = vpop.permute.xlu0 %508
        %v518 = vsub.f32 %v406, %v495
        %v519 = vsub.f32 %v407, %v497
        %v520 = vsub.f32 %v408, %v499
        %v521 = vsub.f32 %v409, %v501
        %v522 = vsub.f32 %v410, %v503
        %v523 = vsub.f32 %v411, %v505
        %v524 = vsub.f32 %v412, %v507
        %v525 = vsub.f32 %v413, %v509
        %vm526 = vcmask 123904
        %527 = vst.msk [vmem:[%s245] sm:$0x3] %vm526, %v518
        %528 = vst.msk [vmem:[%s245 + $0x2] sm:$0x3] %vm526, %v519
        %529 = vst.msk [vmem:[%s245 + $0x4] sm:$0x3] %vm526, %v520
        %530 = vst.msk [vmem:[%s245 + $0x6] sm:$0x3] %vm526, %v521
        %531 = vst.msk [vmem:[%s245 + $0x8] sm:$0x3] %vm526, %v522
        %532 = vst.msk [vmem:[%s245 + $0xa] sm:$0x3] %vm526, %v523
        %533 = vst.msk [vmem:[%s245 + $0xc] sm:$0x3] %vm526, %v524
        %534 = vst.msk [vmem:[%s245 + $0xe] sm:$0x3] %vm526, %v525
        %v535 = vmul.f32 %v256, %v417
        %v536 = vmul.f32 %v257, %v421
        %v537 = vmul.f32 %v258, %v425
        %v538 = vmul.f32 %v259, %v429
        %v539 = vmul.f32 %v260, %v433
        %v540 = vmul.f32 %v261, %v437
        %v541 = vmul.f32 %v262, %v441
        %v542 = vmul.f32 %v263, %v445
        %543 = vrot.lane.b32.xlu0 %v369, 16
        %v544 = vpop.permute.xlu0 %543
        %545 = vrot.lane.b32.xlu0 %v373, 16
        %v546 = vpop.permute.xlu0 %545
        %547 = vrot.lane.b32.xlu0 %v377, 16
        %v548 = vpop.permute.xlu0 %547
        %549 = vrot.lane.b32.xlu0 %v381, 16
        %v550 = vpop.permute.xlu0 %549
        %551 = vrot.lane.b32.xlu0 %v385, 16
        %v552 = vpop.permute.xlu0 %551
        %553 = vrot.lane.b32.xlu0 %v389, 16
        %v554 = vpop.permute.xlu0 %553
        %555 = vrot.lane.b32.xlu0 %v393, 16
        %v556 = vpop.permute.xlu0 %555
        %557 = vrot.lane.b32.xlu0 %v397, 16
        %v558 = vpop.permute.xlu0 %557
        %v567 = vmul.f32 %v256, %v544
        %v568 = vmul.f32 %v257, %v546
        %v569 = vmul.f32 %v258, %v548
        %v570 = vmul.f32 %v259, %v550
        %v571 = vmul.f32 %v260, %v552
        %v572 = vmul.f32 %v261, %v554
        %v573 = vmul.f32 %v262, %v556
        %v574 = vmul.f32 %v263, %v558
        %583 = vrot.lane.b32.xlu0 %v567, 112
        %v584 = vpop.permute.xlu0 %583
        %585 = vrot.lane.b32.xlu0 %v568, 112
        %v586 = vpop.permute.xlu0 %585
        %587 = vrot.lane.b32.xlu0 %v569, 112
        %v588 = vpop.permute.xlu0 %587
        %589 = vrot.lane.b32.xlu0 %v570, 112
        %v590 = vpop.permute.xlu0 %589
        %591 = vrot.lane.b32.xlu0 %v571, 112
        %v592 = vpop.permute.xlu0 %591
        %593 = vrot.lane.b32.xlu0 %v572, 112
        %v594 = vpop.permute.xlu0 %593
        %595 = vrot.lane.b32.xlu0 %v573, 112
        %v596 = vpop.permute.xlu0 %595
        %597 = vrot.lane.b32.xlu0 %v574, 112
        %v598 = vpop.permute.xlu0 %597
        %v607 = vadd.f32 %v535, %v584
        %v608 = vadd.f32 %v536, %v586
        %v609 = vadd.f32 %v537, %v588
        %v610 = vadd.f32 %v538, %v590
        %v611 = vadd.f32 %v539, %v592
        %v612 = vadd.f32 %v540, %v594
        %v613 = vadd.f32 %v541, %v596
        %v614 = vadd.f32 %v542, %v598
        %623 = vrot.lane.b32.xlu0 %v607, 16
        %v624 = vpop.permute.xlu0 %623
        %625 = vrot.lane.b32.xlu0 %v608, 16
        %v626 = vpop.permute.xlu0 %625
        %627 = vrot.lane.b32.xlu0 %v609, 16
        %v628 = vpop.permute.xlu0 %627
        %629 = vrot.lane.b32.xlu0 %v610, 16
        %v630 = vpop.permute.xlu0 %629
        %631 = vrot.lane.b32.xlu0 %v611, 16
        %v632 = vpop.permute.xlu0 %631
        %633 = vrot.lane.b32.xlu0 %v612, 16
        %v634 = vpop.permute.xlu0 %633
        %635 = vrot.lane.b32.xlu0 %v613, 16
        %v636 = vpop.permute.xlu0 %635
        %637 = vrot.lane.b32.xlu0 %v614, 16
        %v638 = vpop.permute.xlu0 %637
        %vm647 = vcmask 255104
        %648 = vst.msk [vmem:[%s245] sm:$0x3] %vm647, %v624
        %649 = vst.msk [vmem:[%s245 + $0x2] sm:$0x3] %vm647, %v626
        %650 = vst.msk [vmem:[%s245 + $0x4] sm:$0x3] %vm647, %v628
        %651 = vst.msk [vmem:[%s245 + $0x6] sm:$0x3] %vm647, %v630
        %652 = vst.msk [vmem:[%s245 + $0x8] sm:$0x3] %vm647, %v632
        %653 = vst.msk [vmem:[%s245 + $0xa] sm:$0x3] %vm647, %v634
        %654 = vst.msk [vmem:[%s245 + $0xc] sm:$0x3] %vm647, %v636
        %655 = vst.msk [vmem:[%s245 + $0xe] sm:$0x3] %vm647, %v638
        %s656 = sand.u32 %s133, 1
        %s657 = scalar_lea.sflag [#allocation4], %s656
        %s658 = sand.u32 %s133, 1
        %s659 = smul.addr %s658, 16
        %s660 = scalar_lea.vmem [#allocation5], %s659
        // Predicated region
        $region37: #{tpu_custom_call.1} parent=31 // pred_check
          %p661 = pneg %p143
        $region38: #{tpu_custom_call.1} parent=31 // pred_check_branch
          %663 = sbr.rel (%p661) target = $region40
        $region39: #{tpu_custom_call.1} parent=31 // pred_region
          %s664 = smul.u32 8, %s27
          %s666 = ssub.s32 256, 256
          %667 = vsyncadd %s657, %s666
          %s668 = smul.addr %s664, 3
          %s669 = sadd.s32 %s26, %s668
          %s670 = smul.addr %s25, 24
          %s671 = sadd.s32 %s669, %s670
          %s672 = smul.addr %s671, 32
          %s673 = scalar_lea.hbm %s3, %s672
          %s674 = sshll.u32 %s660, 4
          %s675 = int_to_ptr.vmem [resolvable:$true] %s674
          %680 = dma.vmem_to_hbm [thread:$0]  %s675, 256, %s673, %s657, 32, 96, 2
        $region40: #{tpu_custom_call.1} parent=31 // pred_fallthru
          _
      $region32: #{tpu_custom_call.1} parent=5 // pred_fallthru
        _
      %p681 = scmp.le.s32.totalorder 2, %s15
      // Predicated region
      $region41: #{tpu_custom_call.1} parent=5 // pred_check
        %p682 = pneg %p681
      $region42: #{tpu_custom_call.1} parent=5 // pred_check_branch
        %684 = sbr.rel (%p682) target = $region44
      $region43: #{tpu_custom_call.1} parent=5 // pred_region
        %s685 = ssub.s32 %s15, 2
        // Predicated region
        $region45: #{tpu_custom_call.1} parent=43 // pred_check
          %p686 = pneg %p149
        $region46: #{tpu_custom_call.1} parent=43 // pred_check_branch
          %688 = sbr.rel (%p686) target = $region48
        $region47: #{tpu_custom_call.1} parent=43 // pred_region
          %s689 = sand.u32 %s134, 1
          %s690 = scalar_lea.sflag [#allocation4], %s689
          %s691 = sand.u32 %s134, 1
          %s692 = smul.addr %s691, 16
          %s693 = scalar_lea.vmem [#allocation5], %s692
          %694 = dma.done %s690, 256
        $region48: #{tpu_custom_call.1} parent=43 // pred_fallthru
          _
      $region44: #{tpu_custom_call.1} parent=5 // pred_fallthru
        _
    $region6: #{tpu_custom_call.1} parent=1 // loop_footer
      %s19 = sadd.s32 1, %s15
    $region7: #{tpu_custom_call.1} parent=1 // loop_footer_branch
      %14 = sbr.rel target = $region3
    $region8: #{tpu_custom_call.1} parent=1 // loop_exit
      _
    %695 = vsyncpa [#allocation3], 1
    %s696 = scalar_lea.sflag [#allocation3], 1
    %697 = vsyncpa %s696, 1
    %698 = vsyncpa [#allocation4], 1
    %s699 = scalar_lea.sflag [#allocation4], 1
    %700 = vsyncpa %s699, 1

</llo_original>
